<compile_context>
chip_gen: v7x
topology: tpu7x:2x2x1
jax: 0.10.0
libtpu: 0.0.40
codegen_flags: <defaults>
</compile_context>

<pallas_src>
import functools

import jax
import jax.numpy as jnp
from jax.experimental import pallas as pl
from jax.experimental.pallas import tpu as pltpu


_VMEM_LIMIT = 48 * 1024 * 1024            # <= v7x 64 MiB/TC, fine on v5e/v6e
_RESIDENT_SUPPORT_BYTES = 16 * 1024 * 1024  # keep support VMEM-resident up to this


def _round_up(n, m):
    return ((n + m - 1) // m) * m


# --------------------------------------------------------------------------
# support = x @ W   (hoisted out of the adjacency grid; computed once)
# --------------------------------------------------------------------------
def _support_kernel(x_ref, w_ref, out_ref):
    out_ref[...] = jnp.dot(
        x_ref[...], w_ref[...], preferred_element_type=jnp.float32
    ).astype(out_ref.dtype)


def _support_matmul(x_p, w_p, *, tm, out_dtype):
    n_pad, f_in_pad = x_p.shape
    f_out_pad = w_p.shape[1]
    return pl.pallas_call(
        _support_kernel,
        out_shape=jax.ShapeDtypeStruct((n_pad, f_out_pad), out_dtype),
        grid_spec=pltpu.PrefetchScalarGridSpec(
            num_scalar_prefetch=0,
            grid=(n_pad // tm,),
            in_specs=[
                pl.BlockSpec((tm, f_in_pad), lambda i: (i, 0)),          # x rows
                pl.BlockSpec((f_in_pad, f_out_pad), lambda i: (0, 0)),   # W resident
            ],
            out_specs=pl.BlockSpec((tm, f_out_pad), lambda i: (i, 0)),
        ),
        compiler_params=pltpu.CompilerParams(
            dimension_semantics=("parallel",),
            vmem_limit_bytes=_VMEM_LIMIT,
        ),
    )(x_p, w_p)


# --------------------------------------------------------------------------
# out = activation(adj @ support + b)      grid = (N/tm rows, N/tk K-slices)
# --------------------------------------------------------------------------
def _adj_layer_kernel(adj_ref, sup_ref, b_ref, out_ref, acc_ref, *,
                      tk, sup_resident, activation, valid_cols):
    k = pl.program_id(1)

    @pl.when(k == 0)
    def _():
        acc_ref[...] = jnp.zeros_like(acc_ref)

    if sup_resident:
        # whole support lives in VMEM across all grid steps; slice the K block
        start = pl.multiple_of(k * tk, tk)
        sup_blk = sup_ref[pl.ds(start, tk), :]
    else:
        sup_blk = sup_ref[...]

    # adj (bf16/f32) @ support (same dtype) with f32 accumulation on the MXU
    acc_ref[...] += jnp.dot(adj_ref[...], sup_blk,
                            preferred_element_type=jnp.float32)

    @pl.when(k == pl.num_programs(1) - 1)
    def _():
        y = acc_ref[...] + b_ref[...]
        if activation == "relu":
            y = jnp.maximum(y, 0.0)
        elif activation == "log_softmax":
            # mask zero-padded output columns so they don't pollute max / sum
            col = jax.lax.broadcasted_iota(jnp.int32, y.shape, 1)
            y = jnp.where(col < valid_cols, y, -1e30)
            m = jnp.max(y, axis=-1, keepdims=True)
            shifted = y - m
            lse = jnp.log(jnp.sum(jnp.exp(shifted), axis=-1, keepdims=True))
            y = shifted - lse
        out_ref[...] = y.astype(out_ref.dtype)


def _adj_layer(adj_p, sup_p, b_p, *, tm, tk, activation, valid_cols, out_dtype):
    n_pad = adj_p.shape[0]
    f_out_pad = sup_p.shape[1]
    grid = (n_pad // tm, n_pad // tk)

    sup_bytes = n_pad * f_out_pad * sup_p.dtype.itemsize
    sup_resident = sup_bytes <= _RESIDENT_SUPPORT_BYTES
    if sup_resident:
        # constant index_map -> DMA'd once, never re-streamed per row tile
        sup_spec = pl.BlockSpec((n_pad, f_out_pad), lambda i, k: (0, 0))
    else:
        # very large graphs: stream K slices instead (keeps VMEM bounded)
        sup_spec = pl.BlockSpec((tk, f_out_pad), lambda i, k: (k, 0))

    kernel = functools.partial(_adj_layer_kernel, tk=tk,
                               sup_resident=sup_resident,
                               activation=activation, valid_cols=valid_cols)
    return pl.pallas_call(
        kernel,
        out_shape=jax.ShapeDtypeStruct((n_pad, f_out_pad), out_dtype),
        grid_spec=pltpu.PrefetchScalarGridSpec(
            num_scalar_prefetch=0,
            grid=grid,
            in_specs=[
                pl.BlockSpec((tm, tk), lambda i, k: (i, k)),          # adj tile
                sup_spec,                                             # support
                pl.BlockSpec((1, f_out_pad), lambda i, k: (0, 0)),    # bias resident
            ],
            out_specs=pl.BlockSpec((tm, f_out_pad), lambda i, k: (i, 0)),
            scratch_shapes=[pltpu.VMEM((tm, f_out_pad), jnp.float32)],
        ),
        compiler_params=pltpu.CompilerParams(
            dimension_semantics=("parallel", "arbitrary"),
            vmem_limit_bytes=_VMEM_LIMIT,
        ),
    )(adj_p, sup_p, b_p)


# --------------------------------------------------------------------------
# full forward pass
# --------------------------------------------------------------------------
@functools.partial(jax.jit, static_argnames=("matmul_dtype", "tile"))
def label_propagation_gcn(adj, x, w1, b1, w2, b2, *,
                          matmul_dtype=jnp.bfloat16, tile=1024):
    """log_softmax(gc2(adj, relu(gc1(adj, x)))) — matches the PyTorch module."""
    n, f_in = x.shape
    hidden = w1.shape[1]
    out_dim = w2.shape[1]
    lane = 128
    f32 = jnp.float32

    # node-axis padding / tile choice
    if n <= tile:
        n_pad = max(_round_up(n, 8), 8)
        tk = n_pad
        # >= 2 row tiles when possible so the "parallel" axis can feed both
        # v7x TensorCores (measured no-op on single-TC v5e/v6e)
        tm = n_pad // 2 if n_pad % 16 == 0 else n_pad
    else:
        tm = tk = tile
        n_pad = _round_up(n, tile)

    # lane-pad feature dims to 128 so MXU operands / output stores are dense
    f_in_pad = _round_up(f_in, lane)
    h_pad = _round_up(hidden, lane)
    o_pad = _round_up(out_dim, lane)

    # skip the full-matrix pad copy when already aligned (pure cast otherwise)
    if n_pad == n:
        adj_p = adj.astype(matmul_dtype)
    else:
        adj_p = jnp.zeros((n_pad, n_pad), matmul_dtype).at[:n, :n].set(
            adj.astype(matmul_dtype))
    if n_pad == n and f_in_pad == f_in:
        x_p = x.astype(matmul_dtype)
    else:
        x_p = jnp.zeros((n_pad, f_in_pad), matmul_dtype).at[:n, :f_in].set(
            x.astype(matmul_dtype))

    w1_p = jnp.zeros((f_in_pad, h_pad), matmul_dtype).at[:f_in, :hidden].set(
        w1.astype(matmul_dtype))
    b1_p = jnp.zeros((1, h_pad), f32).at[0, :hidden].set(b1.astype(f32))
    w2_p = jnp.zeros((h_pad, o_pad), matmul_dtype).at[:hidden, :out_dim].set(
        w2.astype(matmul_dtype))
    b2_p = jnp.zeros((1, o_pad), f32).at[0, :out_dim].set(b2.astype(f32))

    # layer 1: h = relu(adj @ (x @ W1) + b1)
    sup1 = _support_matmul(x_p, w1_p, tm=tm, out_dtype=matmul_dtype)
    h = _adj_layer(adj_p, sup1, b1_p, tm=tm, tk=tk,
                   activation="relu", valid_cols=h_pad, out_dtype=matmul_dtype)

    # layer 2: log_softmax(adj @ (h @ W2) + b2) over the real output columns
    sup2 = _support_matmul(h, w2_p, tm=tm, out_dtype=matmul_dtype)
    logits = _adj_layer(adj_p, sup2, b2_p, tm=tm, tk=tk,
                        activation="log_softmax", valid_cols=out_dim,
                        out_dtype=jnp.float32)
    return logits[:n, :out_dim]


def reference(adj, x, w1, b1, w2, b2):
    hp = jax.lax.Precision.HIGHEST
    h = jnp.maximum(
        jnp.dot(adj, jnp.dot(x, w1, precision=hp), precision=hp) + b1, 0.0)
    logits = jnp.dot(adj, jnp.dot(h, w2, precision=hp), precision=hp) + b2
    return jax.nn.log_softmax(logits, axis=-1)


if __name__ == "__main__":
    key = jax.random.PRNGKey(0)
    k_adj, k_x, k_w1, k_b1, k_w2, k_b2 = jax.random.split(key, 6)

    # shapes consistent with the module: N nodes, input_dim -> hidden -> output
    num_nodes, input_dim, hidden_dim, output_dim = 8, 16, 32, 8

    a = jax.random.uniform(k_adj, (num_nodes, num_nodes), dtype=jnp.float32)
    adj = (a + a.T) * 0.5
    adj = adj / jnp.sum(adj, axis=-1, keepdims=True)
    x = jax.random.uniform(k_x, (num_nodes, input_dim), dtype=jnp.float32)

    # nn.Parameter(torch.rand(...)) -> uniform [0, 1) init, deterministic here
    w1 = jax.random.uniform(k_w1, (input_dim, hidden_dim), dtype=jnp.float32)
    b1 = jax.random.uniform(k_b1, (hidden_dim,), dtype=jnp.float32)
    w2 = jax.random.uniform(k_w2, (hidden_dim, output_dim), dtype=jnp.float32)
    b2 = jax.random.uniform(k_b2, (output_dim,), dtype=jnp.float32)

    ref = reference(adj, x, w1, b1, w2, b2)

    # --- tiny graph, f32-operand path (tight correctness check) ---
    out = label_propagation_gcn(adj, x, w1, b1, w2, b2, matmul_dtype=jnp.float32)
    out = jax.block_until_ready(out)
    assert out.shape == (num_nodes, output_dim)
    assert jnp.allclose(out, ref, atol=1e-4, rtol=1e-4)

    # --- larger graph exercising the (parallel, arbitrary) grid + K accumulator ---
    n2 = 384
    kb = jax.random.split(jax.random.PRNGKey(1), 2)
    a2 = jax.random.uniform(kb[0], (n2, n2), dtype=jnp.float32)
    adj2 = (a2 + a2.T) * 0.5
    adj2 = adj2 / jnp.sum(adj2, axis=-1, keepdims=True)
    x2 = jax.random.uniform(kb[1], (n2, input_dim), dtype=jnp.float32)
    ref2 = reference(adj2, x2, w1, b1, w2, b2)

    out2 = label_propagation_gcn(adj2, x2, w1, b1, w2, b2,
                                 matmul_dtype=jnp.float32, tile=128)  # grid (3, 3)
    out2 = jax.block_until_ready(out2)
    assert out2.shape == (n2, output_dim)
    assert jnp.allclose(out2, ref2, atol=2e-2, rtol=1e-3)

    # --- default fast path: bf16 operands (adj / support / h), f32 accumulation ---
    out_bf16 = label_propagation_gcn(adj2, x2, w1, b1, w2, b2)  # tm=192, grid (2, 1)
    out_bf16 = jax.block_until_ready(out_bf16)
    assert out_bf16.shape == (n2, output_dim)
    assert bool(jnp.all(jnp.isfinite(out_bf16)))
    assert jnp.allclose(out_bf16, ref2, atol=1e-1, rtol=5e-2)

    # --- bf16 with a multi-tile K reduction (grid (3, 3)) ---
    out_bf16_t = label_propagation_gcn(adj2, x2, w1, b1, w2, b2, tile=128)
    out_bf16_t = jax.block_until_ready(out_bf16_t)
    assert jnp.allclose(out_bf16_t, ref2, atol=1e-1, rtol=5e-2)

    print("KERNEL_OK")
</pallas_src>

<mosaic_0001>
module attributes {stable_mosaic.version = 11 : i64} {
  func.func @_support_kernel(%arg0: i32, %arg1: memref<8x128xf32, #tpu.memory_space<vmem>>, %arg2: memref<128x128xf32, #tpu.memory_space<vmem>>, %arg3: memref<8x128xf32, #tpu.memory_space<vmem>>) attributes {dimension_semantics = [#tpu.dimension_semantics<parallel>], iteration_bounds = array<i64: 1>, scalar_prefetch = 0 : i64, scratch_operands = 0 : i64, tpu.core_type = #tpu.core_type<tc>, window_params = [{transform_indices = @transform_0, window_bounds = array<i64: 8, 128>}, {pipeline_mode = #tpu.pipeline_mode<synchronous>, transform_indices = @transform_1, window_bounds = array<i64: 128, 128>}, {transform_indices = @transform_2, window_bounds = array<i64: 8, 128>}]} {
    %c0 = arith.constant 0 : index
    %c0_0 = arith.constant 0 : index
    %0 = vector.load %arg1[%c0, %c0_0] : memref<8x128xf32, #tpu.memory_space<vmem>>, vector<8x128xf32>
    %c0_1 = arith.constant 0 : index
    %c0_2 = arith.constant 0 : index
    %1 = vector.load %arg2[%c0_1, %c0_2] : memref<128x128xf32, #tpu.memory_space<vmem>>, vector<128x128xf32>
    %cst = arith.constant dense<0.000000e+00> : vector<8x128xf32>
    %2 = tpu.matmul %0, %1, %cst {dimension_numbers = #tpu.dot_dimension_numbers<[1], [0], [0], [1], [0, 0, 1, 1], [], []>} : vector<8x128xf32>, vector<128x128xf32>, vector<8x128xf32> -> vector<8x128xf32>
    %c0_3 = arith.constant 0 : index
    %c0_4 = arith.constant 0 : index
    %3 = vector.load %arg3[%c0_3, %c0_4] : memref<8x128xf32, #tpu.memory_space<vmem>>, vector<8x128xf32>
    tpu.vector_store %arg3[%c0_3, %c0_4], %2 {strides = array<i32>} : memref<8x128xf32, #tpu.memory_space<vmem>>, vector<8x128xf32>,
    return
  }
  func.func @transform_0(%arg0: i32) -> (i32, i32) {
    %c0_i32 = arith.constant 0 : i32
    %c0_i32_0 = arith.constant 0 : i32
    return %arg0, %c0_i32 : i32, i32
  }
  func.func @transform_1(%arg0: i32) -> (i32, i32) {
    %c0_i32 = arith.constant 0 : i32
    %c0_i32_0 = arith.constant 0 : i32
    %c0_i32_1 = arith.constant 0 : i32
    return %c0_i32, %c0_i32_0 : i32, i32
  }
  func.func @transform_2(%arg0: i32) -> (i32, i32) {
    %c0_i32 = arith.constant 0 : i32
    %c0_i32_0 = arith.constant 0 : i32
    return %arg0, %c0_i32 : i32, i32
  }
}

module attributes {stable_mosaic.version = 11 : i64} {
  func.func @_adj_layer_kernel(%arg0: i32, %arg1: i32, %arg2: memref<8x8xf32, #tpu.memory_space<vmem>>, %arg3: memref<8x128xf32, #tpu.memory_space<vmem>>, %arg4: memref<1x128xf32, #tpu.memory_space<vmem>>, %arg5: memref<8x128xf32, #tpu.memory_space<vmem>>, %arg6: memref<8x128xf32, #tpu.memory_space<vmem>>) attributes {dimension_semantics = [#tpu.dimension_semantics<parallel>, #tpu.dimension_semantics<arbitrary>], iteration_bounds = array<i64: 1, 1>, scalar_prefetch = 0 : i64, scratch_operands = 1 : i64, tpu.core_type = #tpu.core_type<tc>, window_params = [{transform_indices = @transform_0, window_bounds = array<i64: 8, 8>}, {pipeline_mode = #tpu.pipeline_mode<synchronous>, transform_indices = @transform_1, window_bounds = array<i64: 8, 128>}, {pipeline_mode = #tpu.pipeline_mode<synchronous>, transform_indices = @transform_2, window_bounds = array<i64: 1, 128>}, {transform_indices = @transform_3, window_bounds = array<i64: 8, 128>}]} {
    %c0_i32 = arith.constant 0 : i32
    %0 = arith.cmpi eq, %arg1, %c0_i32 : i32
    %1 = arith.extui %0 : i1 to i32
    %c0_i32_0 = arith.constant 0 : i32
    %2 = arith.cmpi ne, %1, %c0_i32_0 : i32
    scf.if %2 {
      %cst_9 = arith.constant 0.000000e+00 : f32
      %15 = vector.broadcast %cst_9 : f32 to vector<8x128xf32>
      %c0_10 = arith.constant 0 : index
      %c0_11 = arith.constant 0 : index
      %16 = vector.load %arg6[%c0_10, %c0_11] : memref<8x128xf32, #tpu.memory_space<vmem>>, vector<8x128xf32>
      tpu.vector_store %arg6[%c0_10, %c0_11], %15 {strides = array<i32>} : memref<8x128xf32, #tpu.memory_space<vmem>>, vector<8x128xf32>,
    } else {
    }
    %c8_i32 = arith.constant 8 : i32
    %3 = arith.muli %arg1, %c8_i32 : i32
    %4 = tpu.assume_multiple %3, 8 : i32
    %5 = arith.index_cast %4 : i32 to index
    %c0 = arith.constant 0 : index
    %6 = vector.load %arg3[%5, %c0] : memref<8x128xf32, #tpu.memory_space<vmem>>, vector<8x128xf32>
    %c0_1 = arith.constant 0 : index
    %c0_2 = arith.constant 0 : index
    %7 = vector.load %arg6[%c0_1, %c0_2] : memref<8x128xf32, #tpu.memory_space<vmem>>, vector<8x128xf32>
    %c0_3 = arith.constant 0 : index
    %c0_4 = arith.constant 0 : index
    %8 = vector.load %arg2[%c0_3, %c0_4] : memref<8x8xf32, #tpu.memory_space<vmem>>, vector<8x8xf32>
    %cst = arith.constant dense<0.000000e+00> : vector<8x128xf32>
    %9 = tpu.matmul %8, %6, %cst {dimension_numbers = #tpu.dot_dimension_numbers<[1], [0], [0], [1], [0, 0, 1, 1], [], []>} : vector<8x8xf32>, vector<8x128xf32>, vector<8x128xf32> -> vector<8x128xf32>
    %10 = arith.addf %7, %9 : vector<8x128xf32>
    %c0_5 = arith.constant 0 : index
    %c0_6 = arith.constant 0 : index
    %11 = vector.load %arg6[%c0_5, %c0_6] : memref<8x128xf32, #tpu.memory_space<vmem>>, vector<8x128xf32>
    tpu.vector_store %arg6[%c0_5, %c0_6], %10 {strides = array<i32>} : memref<8x128xf32, #tpu.memory_space<vmem>>, vector<8x128xf32>,
    %c0_i32_7 = arith.constant 0 : i32
    %12 = arith.cmpi eq, %arg1, %c0_i32_7 : i32
    %13 = arith.extui %12 : i1 to i32
    %c0_i32_8 = arith.constant 0 : i32
    %14 = arith.cmpi ne, %13, %c0_i32_8 : i32
    scf.if %14 {
      %c0_9 = arith.constant 0 : index
      %c0_10 = arith.constant 0 : index
      %15 = vector.load %arg6[%c0_9, %c0_10] : memref<8x128xf32, #tpu.memory_space<vmem>>, vector<8x128xf32>
      %c0_11 = arith.constant 0 : index
      %c0_12 = arith.constant 0 : index
      %16 = vector.load %arg4[%c0_11, %c0_12] : memref<1x128xf32, #tpu.memory_space<vmem>>, vector<1x128xf32>
      %17 = vector.broadcast %16 : vector<1x128xf32> to vector<8x128xf32>
      %18 = arith.addf %15, %17 : vector<8x128xf32>
      %cst_13 = arith.constant 0.000000e+00 : f32
      %19 = vector.broadcast %cst_13 : f32 to vector<8x128xf32>
      %20 = arith.maximumf %18, %19 : vector<8x128xf32>
      %c0_14 = arith.constant 0 : index
      %c0_15 = arith.constant 0 : index
      %21 = vector.load %arg5[%c0_14, %c0_15] : memref<8x128xf32, #tpu.memory_space<vmem>>, vector<8x128xf32>
      tpu.vector_store %arg5[%c0_14, %c0_15], %20 {strides = array<i32>} : memref<8x128xf32, #tpu.memory_space<vmem>>, vector<8x128xf32>,
    } else {
    }
    return
  }
  func.func @transform_0(%arg0: i32, %arg1: i32) -> (i32, i32) {
    %c0_i32 = arith.constant 0 : i32
    return %arg0, %arg1 : i32, i32
  }
  func.func @transform_1(%arg0: i32, %arg1: i32) -> (i32, i32) {
    %c0_i32 = arith.constant 0 : i32
    %c0_i32_0 = arith.constant 0 : i32
    %c0_i32_1 = arith.constant 0 : i32
    return %c0_i32, %c0_i32_0 : i32, i32
  }
  func.func @transform_2(%arg0: i32, %arg1: i32) -> (i32, i32) {
    %c0_i32 = arith.constant 0 : i32
    %c0_i32_0 = arith.constant 0 : i32
    %c0_i32_1 = arith.constant 0 : i32
    return %c0_i32, %c0_i32_0 : i32, i32
  }
  func.func @transform_3(%arg0: i32, %arg1: i32) -> (i32, i32) {
    %c0_i32 = arith.constant 0 : i32
    %c0_i32_0 = arith.constant 0 : i32
    return %arg0, %c0_i32 : i32, i32
  }
}

module attributes {stable_mosaic.version = 11 : i64} {
  func.func @_adj_layer_kernel(%arg0: i32, %arg1: i32, %arg2: memref<8x8xf32, #tpu.memory_space<vmem>>, %arg3: memref<8x128xf32, #tpu.memory_space<vmem>>, %arg4: memref<1x128xf32, #tpu.memory_space<vmem>>, %arg5: memref<8x128xf32, #tpu.memory_space<vmem>>, %arg6: memref<8x128xf32, #tpu.memory_space<vmem>>) attributes {dimension_semantics = [#tpu.dimension_semantics<parallel>, #tpu.dimension_semantics<arbitrary>], iteration_bounds = array<i64: 1, 1>, scalar_prefetch = 0 : i64, scratch_operands = 1 : i64, tpu.core_type = #tpu.core_type<tc>, window_params = [{transform_indices = @transform_0, window_bounds = array<i64: 8, 8>}, {pipeline_mode = #tpu.pipeline_mode<synchronous>, transform_indices = @transform_1, window_bounds = array<i64: 8, 128>}, {pipeline_mode = #tpu.pipeline_mode<synchronous>, transform_indices = @transform_2, window_bounds = array<i64: 1, 128>}, {transform_indices = @transform_3, window_bounds = array<i64: 8, 128>}]} {
    %c0_i32 = arith.constant 0 : i32
    %0 = arith.cmpi eq, %arg1, %c0_i32 : i32
    %1 = arith.extui %0 : i1 to i32
    %c0_i32_0 = arith.constant 0 : i32
    %2 = arith.cmpi ne, %1, %c0_i32_0 : i32
    scf.if %2 {
      %cst_9 = arith.constant 0.000000e+00 : f32
      %15 = vector.broadcast %cst_9 : f32 to vector<8x128xf32>
      %c0_10 = arith.constant 0 : index
      %c0_11 = arith.constant 0 : index
      %16 = vector.load %arg6[%c0_10, %c0_11] : memref<8x128xf32, #tpu.memory_space<vmem>>, vector<8x128xf32>
      tpu.vector_store %arg6[%c0_10, %c0_11], %15 {strides = array<i32>} : memref<8x128xf32, #tpu.memory_space<vmem>>, vector<8x128xf32>,
    } else {
    }
    %c8_i32 = arith.constant 8 : i32
    %3 = arith.muli %arg1, %c8_i32 : i32
    %4 = tpu.assume_multiple %3, 8 : i32
    %5 = arith.index_cast %4 : i32 to index
    %c0 = arith.constant 0 : index
    %6 = vector.load %arg3[%5, %c0] : memref<8x128xf32, #tpu.memory_space<vmem>>, vector<8x128xf32>
    %c0_1 = arith.constant 0 : index
    %c0_2 = arith.constant 0 : index
    %7 = vector.load %arg6[%c0_1, %c0_2] : memref<8x128xf32, #tpu.memory_space<vmem>>, vector<8x128xf32>
    %c0_3 = arith.constant 0 : index
    %c0_4 = arith.constant 0 : index
    %8 = vector.load %arg2[%c0_3, %c0_4] : memref<8x8xf32, #tpu.memory_space<vmem>>, vector<8x8xf32>
    %cst = arith.constant dense<0.000000e+00> : vector<8x128xf32>
    %9 = tpu.matmul %8, %6, %cst {dimension_numbers = #tpu.dot_dimension_numbers<[1], [0], [0], [1], [0, 0, 1, 1], [], []>} : vector<8x8xf32>, vector<8x128xf32>, vector<8x128xf32> -> vector<8x128xf32>
    %10 = arith.addf %7, %9 : vector<8x128xf32>
    %c0_5 = arith.constant 0 : index
    %c0_6 = arith.constant 0 : index
    %11 = vector.load %arg6[%c0_5, %c0_6] : memref<8x128xf32, #tpu.memory_space<vmem>>, vector<8x128xf32>
    tpu.vector_store %arg6[%c0_5, %c0_6], %10 {strides = array<i32>} : memref<8x128xf32, #tpu.memory_space<vmem>>, vector<8x128xf32>,
    %c0_i32_7 = arith.constant 0 : i32
    %12 = arith.cmpi eq, %arg1, %c0_i32_7 : i32
    %13 = arith.extui %12 : i1 to i32
    %c0_i32_8 = arith.constant 0 : i32
    %14 = arith.cmpi ne, %13, %c0_i32_8 : i32
    scf.if %14 {
      %c0_9 = arith.constant 0 : index
      %c0_10 = arith.constant 0 : index
      %15 = vector.load %arg6[%c0_9, %c0_10] : memref<8x128xf32, #tpu.memory_space<vmem>>, vector<8x128xf32>
      %c0_11 = arith.constant 0 : index
      %c0_12 = arith.constant 0 : index
      %16 = vector.load %arg4[%c0_11, %c0_12] : memref<1x128xf32, #tpu.memory_space<vmem>>, vector<1x128xf32>
      %17 = vector.broadcast %16 : vector<1x128xf32> to vector<8x128xf32>
      %18 = arith.addf %15, %17 : vector<8x128xf32>
      %19 = tpu.iota {dimensions = array<i32: 1>} : vector<8x128xi32>
      %c8_i32_13 = arith.constant 8 : i32
      %20 = vector.broadcast %c8_i32_13 : i32 to vector<8x128xi32>
      %21 = arith.cmpi slt, %19, %20 : vector<8x128xi32>
      %cst_14 = arith.constant -1.000000e+30 : f32
      %22 = vector.broadcast %cst_14 : f32 to vector<8x128xf32>
      %23 = arith.select %21, %18, %22 : vector<8x128xi1>, vector<8x128xf32>
      %cst_15 = arith.constant dense<0xFF800000> : vector<8xf32>
      %24 = vector.multi_reduction <maximumf>, %23, %cst_15 [1] : vector<8x128xf32> to vector<8xf32>
      %25 = vector.shape_cast %24 : vector<8xf32> to vector<8x1xf32>
      %26 = vector.broadcast %25 : vector<8x1xf32> to vector<8x128xf32>
      %27 = arith.subf %23, %26 : vector<8x128xf32>
      %28 = math.exp %27 : vector<8x128xf32>
      %cst_16 = arith.constant dense<0.000000e+00> : vector<8xf32>
      %29 = vector.multi_reduction <add>, %28, %cst_16 [1] : vector<8x128xf32> to vector<8xf32>
      %30 = vector.shape_cast %29 : vector<8xf32> to vector<8x1xf32>
      %31 = math.log %30 : vector<8x1xf32>
      %32 = vector.broadcast %31 : vector<8x1xf32> to vector<8x128xf32>
      %33 = arith.subf %27, %32 : vector<8x128xf32>
      %c0_17 = arith.constant 0 : index
      %c0_18 = arith.constant 0 : index
      %34 = vector.load %arg5[%c0_17, %c0_18] : memref<8x128xf32, #tpu.memory_space<vmem>>, vector<8x128xf32>
      tpu.vector_store %arg5[%c0_17, %c0_18], %33 {strides = array<i32>} : memref<8x128xf32, #tpu.memory_space<vmem>>, vector<8x128xf32>,
    } else {
    }
    return
  }
  func.func @transform_0(%arg0: i32, %arg1: i32) -> (i32, i32) {
    %c0_i32 = arith.constant 0 : i32
    return %arg0, %arg1 : i32, i32
  }
  func.func @transform_1(%arg0: i32, %arg1: i32) -> (i32, i32) {
    %c0_i32 = arith.constant 0 : i32
    %c0_i32_0 = arith.constant 0 : i32
    %c0_i32_1 = arith.constant 0 : i32
    return %c0_i32, %c0_i32_0 : i32, i32
  }
  func.func @transform_2(%arg0: i32, %arg1: i32) -> (i32, i32) {
    %c0_i32 = arith.constant 0 : i32
    %c0_i32_0 = arith.constant 0 : i32
    %c0_i32_1 = arith.constant 0 : i32
    return %c0_i32, %c0_i32_0 : i32, i32
  }
  func.func @transform_3(%arg0: i32, %arg1: i32) -> (i32, i32) {
    %c0_i32 = arith.constant 0 : i32
    %c0_i32_0 = arith.constant 0 : i32
    return %arg0, %c0_i32 : i32, i32
  }
}

</mosaic_0001>

<llo_original>
// kernel: label_propagation_gcn.4
$region0: #{label_propagation_gcn.4}
  #allocation0 [shape = 'u32[]', space=smem, size = 0x4, offset = 0x4, fixed_abs, tag = 'smem constant byte address 0x4 - core index']
  #allocation1 [shape = 'u32[144,128]{1,0:T(1,128)}', space=vmem, size = 0x12000, scoped, tag = 'internal scratch']
  %s0 = inlined_call_operand.vmem [shape: f32[8,128], index: 0, kind: input, shape index: {}]
  %s1 = inlined_call_operand.vmem [shape: f32[128,128], index: 1, kind: input, shape index: {}]
  %s2 = inlined_call_operand.vmem [shape: f32[8,128], index: 2, kind: output, shape index: {}]
  %s3 = sld [smem:[#allocation0]]
  $region18: #{label_propagation_gcn.4} parent=0
    _
  %s5 = ssub.s32 1, %s3
  %s6 = scalar_select 0, %s5, %s3
  // Predicated region
  $region2: #{label_propagation_gcn.4} parent=0 // pred_check
    _
  $region3: #{label_propagation_gcn.4} parent=0 // pred_check_branch
    %8 = sbr.rel (0) target = $region5
  $region4: #{label_propagation_gcn.4} parent=0 // pred_region
    _
  $region5: #{label_propagation_gcn.4} parent=0 // pred_fallthru
    _
  // Predicated region
  $region6: #{label_propagation_gcn.4} parent=0 // pred_check
    _
  $region7: #{label_propagation_gcn.4} parent=0 // pred_check_branch
    %10 = sbr.rel (0) target = $region9
  $region8: #{label_propagation_gcn.4} parent=0 // pred_region
    _
  $region9: #{label_propagation_gcn.4} parent=0 // pred_fallthru
    _
  %v11 = vld [vmem:[%s0] sm:$0xff]
  %v12 = vld [vmem:[%s1] sm:$0xff]
  %v13 = vld [vmem:[%s1 + $0x8] sm:$0xff]
  %v14 = vld [vmem:[%s1 + $0x10] sm:$0xff]
  %v15 = vld [vmem:[%s1 + $0x18] sm:$0xff]
  %v16 = vld [vmem:[%s1 + $0x20] sm:$0xff]
  %v17 = vld [vmem:[%s1 + $0x28] sm:$0xff]
  %v18 = vld [vmem:[%s1 + $0x30] sm:$0xff]
  %v19 = vld [vmem:[%s1 + $0x38] sm:$0xff]
  %v20 = vld [vmem:[%s1 + $0x40] sm:$0xff]
  %v21 = vld [vmem:[%s1 + $0x48] sm:$0xff]
  %v22 = vld [vmem:[%s1 + $0x50] sm:$0xff]
  %v23 = vld [vmem:[%s1 + $0x58] sm:$0xff]
  %v24 = vld [vmem:[%s1 + $0x60] sm:$0xff]
  %v25 = vld [vmem:[%s1 + $0x68] sm:$0xff]
  %v26 = vld [vmem:[%s1 + $0x70] sm:$0xff]
  %v27 = vld [vmem:[%s1 + $0x78] sm:$0xff]
  %28 = vmatprep.subr.mxu0 0.0
  %29 = vmatpush1.msra.mxu0 %v12
  %30 = vmatprep.subr.mxu0 0.0
  %31 = vmatpush1.msra.mxu0 %v13
  %32 = vmatprep.subr.mxu0 0.0
  %33 = vmatpush1.msra.mxu0 %v14
  %34 = vmatprep.subr.mxu0 0.0
  %35 = vmatpush1.msra.mxu0 %v15
  %36 = vmatprep.subr.mxu0 0.0
  %37 = vmatpush1.msra.mxu0 %v16
  %38 = vmatprep.subr.mxu0 0.0
  %39 = vmatpush1.msra.mxu0 %v17
  %40 = vmatprep.subr.mxu0 0.0
  %41 = vmatpush1.msra.mxu0 %v18
  %42 = vmatprep.subr.mxu0 0.0
  %43 = vmatpush1.msra.mxu0 %v19
  %44 = vmatprep.subr.mxu0 0.0
  %45 = vmatpush1.msra.mxu0 %v20
  %46 = vmatprep.subr.mxu0 0.0
  %47 = vmatpush1.msra.mxu0 %v21
  %48 = vmatprep.subr.mxu0 0.0
  %49 = vmatpush1.msra.mxu0 %v22
  %50 = vmatprep.subr.mxu0 0.0
  %51 = vmatpush1.msra.mxu0 %v23
  %52 = vmatprep.subr.mxu0 0.0
  %53 = vmatpush1.msra.mxu0 %v24
  %54 = vmatprep.subr.mxu0 0.0
  %55 = vmatpush1.msra.mxu0 %v25
  %56 = vmatprep.subr.mxu0 0.0
  %57 = vmatpush1.msra.mxu0 %v26
  %58 = vmatprep.subr.mxu0 0.0
  %59 = vmatpush1.msra.mxu0 %v27
  %60 = vmatprep.subr.mxu0 0.0
  %61 = vmatpush1.msra.mxu0 0.0
  %62 = vmatprep.subr.mxu0 0.0
  %63 = vmatpush1.msra.mxu0 0.0
  %64 = vmatprep.subr.mxu0 0.0
  %65 = vmatpush1.msra.mxu0 0.0
  %66 = vmatprep.subr.mxu0 0.0
  %67 = vmatpush1.msra.mxu0 0.0
  %68 = vmatprep.subr.mxu0 0.0
  %69 = vmatpush1.msra.mxu0 0.0
  %70 = vmatprep.subr.mxu0 0.0
  %71 = vmatpush1.msra.mxu0 0.0
  %72 = vmatprep.subr.mxu0 0.0
  %73 = vmatpush1.msra.mxu0 0.0
  %74 = vmatprep.subr.mxu0 0.0
  %75 = vmatpush1.msra.mxu0 0.0
  %76 = vmatprep.subr.mxu0 0.0
  %77 = vmatpush1.msra.mxu0 0.0
  %78 = vmatprep.subr.mxu0 0.0
  %79 = vmatpush1.msra.mxu0 0.0
  %80 = vmatprep.subr.mxu0 0.0
  %81 = vmatpush1.msra.mxu0 0.0
  %82 = vmatprep.subr.mxu0 0.0
  %83 = vmatpush1.msra.mxu0 0.0
  %84 = vmatprep.subr.mxu0 0.0
  %85 = vmatpush1.msra.mxu0 0.0
  %86 = vmatprep.subr.mxu0 0.0
  %87 = vmatpush1.msra.mxu0 0.0
  %88 = vmatprep.subr.mxu0 0.0
  %89 = vmatpush1.msra.mxu0 0.0
  %90 = vmatprep.subr.mxu0 0.0
  %91 = vmatpush1.msra.mxu0 0.0
  %92 = vmatprep.mubr.f32.mxu0 0.0
  %93 = vmatmul.mubr.f32.gmra.mrb[0].mxu0 %v11
  %v94 = vpop.f32.mrb[0].mxu0
  %v95 = vadd.f32 0.0, %v94
  %v96 = vpop.f32.mrb[0].mxu0
  %97 = vdwg.mxu0
  %98 = vst [vmem:[%s2] sm:$0xff] %v95
  // Predicated region
  $region10: #{label_propagation_gcn.4} parent=0 // pred_check
    _
  $region11: #{label_propagation_gcn.4} parent=0 // pred_check_branch
    %100 = sbr.rel (0) target = $region13
  $region12: #{label_propagation_gcn.4} parent=0 // pred_region
    _
  $region13: #{label_propagation_gcn.4} parent=0 // pred_fallthru
    _
  // Predicated region
  $region14: #{label_propagation_gcn.4} parent=0 // pred_check
    _
  $region15: #{label_propagation_gcn.4} parent=0 // pred_check_branch
    %102 = sbr.rel (0) target = $region17
  $region16: #{label_propagation_gcn.4} parent=0 // pred_region
    _
  $region17: #{label_propagation_gcn.4} parent=0 // pred_fallthru
    _

// kernel: label_propagation_gcn.7
$region0: #{label_propagation_gcn.7}
  #allocation0 [shape = 'u32[]', space=smem, size = 0x4, offset = 0x4, fixed_abs, tag = 'smem constant byte address 0x4 - core index']
  #allocation1 [shape = 'u32[144,128]{1,0:T(1,128)}', space=vmem, size = 0x12000, scoped, tag = 'internal scratch']
  #allocation2 [shape = 'f32[8,128]{1,0:T(8,128)}', space=vmem, size = 0x1000, scoped, tag = 'scratch operand']
  %s0 = inlined_call_operand.vmem [shape: f32[8,8], index: 0, kind: input, shape index: {}]
  %s1 = inlined_call_operand.vmem [shape: f32[8,128], index: 1, kind: input, shape index: {}]
  %s2 = inlined_call_operand.vmem [shape: f32[1,128], index: 2, kind: input, shape index: {}]
  %s3 = inlined_call_operand.hbm [shape: f32[8,128], index: 3, kind: output, shape index: {}]
  %s4 = sld [smem:[#allocation0]]
  $region30: #{label_propagation_gcn.7} parent=0
    _
  %s6 = ssub.s32 1, %s4
  %s7 = scalar_select 0, %s6, %s4
  $region1: #{label_propagation_gcn.7} parent=0
    #allocation3 [shape = 'u8[4096]{0}', space=vmem, size = 0x1000, scoped, tag = 'output window, operand 0, single buffered']
    #allocation4 [shape = 's32[1]{0}', space=sflag, size = 0x4, scoped, tag = 'scoped memory for label_propagation_gcn.7']
    %8 = vsyncpa [#allocation4], 0
    // Predicated region
    $region2: #{label_propagation_gcn.7} parent=1 // pred_check
      _
    $region3: #{label_propagation_gcn.7} parent=1 // pred_check_branch
      %10 = sbr.rel (0) target = $region5
    $region4: #{label_propagation_gcn.7} parent=1 // pred_region
      _
    $region5: #{label_propagation_gcn.7} parent=1 // pred_fallthru
      _
    // Predicated region
    $region6: #{label_propagation_gcn.7} parent=1 // pred_check
      _
    $region7: #{label_propagation_gcn.7} parent=1 // pred_check_branch
      %12 = sbr.rel (0) target = $region9
    $region8: #{label_propagation_gcn.7} parent=1 // pred_region
      _
    $region9: #{label_propagation_gcn.7} parent=1 // pred_fallthru
      _
    // Predicated region
    $region10: #{label_propagation_gcn.7} parent=1 // pred_check
      _
    $region11: #{label_propagation_gcn.7} parent=1 // pred_check_branch
      %14 = sbr.rel (0) target = $region13
    $region12: #{label_propagation_gcn.7} parent=1 // pred_region
      _
    $region13: #{label_propagation_gcn.7} parent=1 // pred_fallthru
      _
    %p15 = scmp.eq.s32.totalorder 0, 0
    // Predicated region
    $region14: #{label_propagation_gcn.7} parent=1 // pred_check
      %p16 = pneg %p15
    $region15: #{label_propagation_gcn.7} parent=1 // pred_check_branch
      %18 = sbr.rel (%p16) target = $region17
    $region16: #{label_propagation_gcn.7} parent=1 // pred_region
      %19 = vst [vmem:[#allocation2] sm:$0xff] 0.0
    $region17: #{label_propagation_gcn.7} parent=1 // pred_fallthru
      _
    %s20 = smul.u32 0, 8
    %s21 = scalar_lea.vmem %s1, %s20
    %v22 = vld [vmem:[%s21] sm:$0xff]
    %v23 = vld [vmem:[#allocation2] sm:$0xff]
    %v24 = vld [vmem:[%s0] sm:$0xff]
    %vm25 = vcmask 64512
    %v27 = vsel %vm25, %v24, 0
    %29 = vmatprep.subr.mxu0 0.0
    %30 = vmatpush1.msra.mxu0 %v22
    %31 = vmatprep.subr.mxu0 0.0
    %32 = vmatpush1.msra.mxu0 0.0
    %33 = vmatprep.subr.mxu0 0.0
    %34 = vmatpush1.msra.mxu0 0.0
    %35 = vmatprep.subr.mxu0 0.0
    %36 = vmatpush1.msra.mxu0 0.0
    %37 = vmatprep.subr.mxu0 0.0
    %38 = vmatpush1.msra.mxu0 0.0
    %39 = vmatprep.subr.mxu0 0.0
    %40 = vmatpush1.msra.mxu0 0.0
    %41 = vmatprep.subr.mxu0 0.0
    %42 = vmatpush1.msra.mxu0 0.0
    %43 = vmatprep.subr.mxu0 0.0
    %44 = vmatpush1.msra.mxu0 0.0
    %45 = vmatprep.subr.mxu0 0.0
    %46 = vmatpush1.msra.mxu0 0.0
    %47 = vmatprep.subr.mxu0 0.0
    %48 = vmatpush1.msra.mxu0 0.0
    %49 = vmatprep.subr.mxu0 0.0
    %50 = vmatpush1.msra.mxu0 0.0
    %51 = vmatprep.subr.mxu0 0.0
    %52 = vmatpush1.msra.mxu0 0.0
    %53 = vmatprep.subr.mxu0 0.0
    %54 = vmatpush1.msra.mxu0 0.0
    %55 = vmatprep.subr.mxu0 0.0
    %56 = vmatpush1.msra.mxu0 0.0
    %57 = vmatprep.subr.mxu0 0.0
    %58 = vmatpush1.msra.mxu0 0.0
    %59 = vmatprep.subr.mxu0 0.0
    %60 = vmatpush1.msra.mxu0 0.0
    %61 = vmatprep.subr.mxu0 0.0
    %62 = vmatpush1.msra.mxu0 0.0
    %63 = vmatprep.subr.mxu0 0.0
    %64 = vmatpush1.msra.mxu0 0.0
    %65 = vmatprep.subr.mxu0 0.0
    %66 = vmatpush1.msra.mxu0 0.0
    %67 = vmatprep.subr.mxu0 0.0
    %68 = vmatpush1.msra.mxu0 0.0
    %69 = vmatprep.subr.mxu0 0.0
    %70 = vmatpush1.msra.mxu0 0.0
    %71 = vmatprep.subr.mxu0 0.0
    %72 = vmatpush1.msra.mxu0 0.0
    %73 = vmatprep.subr.mxu0 0.0
    %74 = vmatpush1.msra.mxu0 0.0
    %75 = vmatprep.subr.mxu0 0.0
    %76 = vmatpush1.msra.mxu0 0.0
    %77 = vmatprep.subr.mxu0 0.0
    %78 = vmatpush1.msra.mxu0 0.0
    %79 = vmatprep.subr.mxu0 0.0
    %80 = vmatpush1.msra.mxu0 0.0
    %81 = vmatprep.subr.mxu0 0.0
    %82 = vmatpush1.msra.mxu0 0.0
    %83 = vmatprep.subr.mxu0 0.0
    %84 = vmatpush1.msra.mxu0 0.0
    %85 = vmatprep.subr.mxu0 0.0
    %86 = vmatpush1.msra.mxu0 0.0
    %87 = vmatprep.subr.mxu0 0.0
    %88 = vmatpush1.msra.mxu0 0.0
    %89 = vmatprep.subr.mxu0 0.0
    %90 = vmatpush1.msra.mxu0 0.0
    %91 = vmatprep.subr.mxu0 0.0
    %92 = vmatpush1.msra.mxu0 0.0
    %93 = vmatprep.mubr.f32.mxu0 0.0
    %94 = vmatmul.mubr.f32.gmra.mrb[0].mxu0 %v27
    %v95 = vpop.f32.mrb[0].mxu0
    %v96 = vadd.f32 0.0, %v95
    %v97 = vpop.f32.mrb[0].mxu0
    %98 = vdwg.mxu0
    %v99 = vadd.f32 %v23, %v96
    %100 = vst [vmem:[#allocation2] sm:$0xff] %v99
    // Predicated region
    $region18: #{label_propagation_gcn.7} parent=1 // pred_check
      %p101 = pneg %p15
    $region19: #{label_propagation_gcn.7} parent=1 // pred_check_branch
      %103 = sbr.rel (%p101) target = $region21
    $region20: #{label_propagation_gcn.7} parent=1 // pred_region
      %v104 = vld [vmem:[#allocation2] sm:$0xff]
      %v105 = vld [vmem:[%s2] sm:$0x1]
      %v107 = vlaneseq
      %v108 = vshrl.u32 %v107, 7
      %v109 = vsub.s32 0, %v108
      %v110 = vrot.slane %v105, %v109
      %v112 = vadd.f32 %v104, %v110
      %v113 = vlaneseq
      %v114 = vand.u32 %v113, 127
      %vm115 = vcmp.lt.s32.totalorder %v114, 8
      %v116 = vsel %vm115, %v112, -1e+30
      %117 = vmax.xlane.f32.xlu0 %v116
      %v118 = vpop.xlane.xlu0 %117
      %v119 = vsub.f32 %v116, %v118
      %v120 = vmul.f32 %v119, 1.442695
      %v121 = vpow.pop %v120
      %122 = vadd.xlane.f32.xlu0 %v121
      %v123 = vpop.xlane.xlu0 %122
      %v124 = vlog2.pop %v123
      %v125 = vmul.f32 %v124, 0.6931472
      %v126 = vsub.f32 %v119, %v125
      %127 = vst [vmem:[#allocation3] sm:$0xff] %v126
    $region21: #{label_propagation_gcn.7} parent=1 // pred_fallthru
      _
    // Predicated region
    $region22: #{label_propagation_gcn.7} parent=1 // pred_check
      _
    $region23: #{label_propagation_gcn.7} parent=1 // pred_check_branch
      %129 = sbr.rel (0) target = $region25
    $region24: #{label_propagation_gcn.7} parent=1 // pred_region
      %s131 = ssub.s32 128, 128
      %132 = vsyncadd [#allocation4], %s131
      %s134 = sshll.u32 [#allocation3], 4
      %s135 = int_to_ptr.vmem [resolvable:$true] %s134
      %137 = dma.vmem_to_hbm [thread:$0]  %s135, 128, %s3, [#allocation4]
    $region25: #{label_propagation_gcn.7} parent=1 // pred_fallthru
      _
    // Predicated region
    $region26: #{label_propagation_gcn.7} parent=1 // pred_check
      _
    $region27: #{label_propagation_gcn.7} parent=1 // pred_check_branch
      %139 = sbr.rel (0) target = $region29
    $region28: #{label_propagation_gcn.7} parent=1 // pred_region
      %140 = dma.done [#allocation4], 128
    $region29: #{label_propagation_gcn.7} parent=1 // pred_fallthru
      _
    %141 = vsyncpa [#allocation4], 1

// kernel: label_propagation_gcn.5
$region0: #{label_propagation_gcn.5}
  #allocation0 [shape = 'u32[]', space=smem, size = 0x4, offset = 0x4, fixed_abs, tag = 'smem constant byte address 0x4 - core index']
  #allocation1 [shape = 'u32[144,128]{1,0:T(1,128)}', space=vmem, size = 0x12000, scoped, tag = 'internal scratch']
  #allocation2 [shape = 'f32[8,128]{1,0:T(8,128)}', space=vmem, size = 0x1000, scoped, tag = 'scratch operand']
  %s0 = inlined_call_operand.vmem [shape: f32[8,8], index: 0, kind: input, shape index: {}]
  %s1 = inlined_call_operand.vmem [shape: f32[8,128], index: 1, kind: input, shape index: {}]
  %s2 = inlined_call_operand.vmem [shape: f32[1,128], index: 2, kind: input, shape index: {}]
  %s3 = inlined_call_operand.vmem [shape: f32[8,128], index: 3, kind: output, shape index: {}]
  %s4 = sld [smem:[#allocation0]]
  $region30: #{label_propagation_gcn.5} parent=0
    _
  %s6 = ssub.s32 1, %s4
  %s7 = scalar_select 0, %s6, %s4
  // Predicated region
  $region2: #{label_propagation_gcn.5} parent=0 // pred_check
    _
  $region3: #{label_propagation_gcn.5} parent=0 // pred_check_branch
    %9 = sbr.rel (0) target = $region5
  $region4: #{label_propagation_gcn.5} parent=0 // pred_region
    _
  $region5: #{label_propagation_gcn.5} parent=0 // pred_fallthru
    _
  // Predicated region
  $region6: #{label_propagation_gcn.5} parent=0 // pred_check
    _
  $region7: #{label_propagation_gcn.5} parent=0 // pred_check_branch
    %11 = sbr.rel (0) target = $region9
  $region8: #{label_propagation_gcn.5} parent=0 // pred_region
    _
  $region9: #{label_propagation_gcn.5} parent=0 // pred_fallthru
    _
  // Predicated region
  $region10: #{label_propagation_gcn.5} parent=0 // pred_check
    _
  $region11: #{label_propagation_gcn.5} parent=0 // pred_check_branch
    %13 = sbr.rel (0) target = $region13
  $region12: #{label_propagation_gcn.5} parent=0 // pred_region
    _
  $region13: #{label_propagation_gcn.5} parent=0 // pred_fallthru
    _
  %p14 = scmp.eq.s32.totalorder 0, 0
  // Predicated region
  $region14: #{label_propagation_gcn.5} parent=0 // pred_check
    %p15 = pneg %p14
  $region15: #{label_propagation_gcn.5} parent=0 // pred_check_branch
    %17 = sbr.rel (%p15) target = $region17
  $region16: #{label_propagation_gcn.5} parent=0 // pred_region
    %18 = vst [vmem:[#allocation2] sm:$0xff] 0.0
  $region17: #{label_propagation_gcn.5} parent=0 // pred_fallthru
    _
  %s19 = smul.u32 0, 8
  %s20 = scalar_lea.vmem %s1, %s19
  %v21 = vld [vmem:[%s20] sm:$0xff]
  %v22 = vld [vmem:[#allocation2] sm:$0xff]
  %v23 = vld [vmem:[%s0] sm:$0xff]
  %vm24 = vcmask 64512
  %v26 = vsel %vm24, %v23, 0
  %28 = vmatprep.subr.mxu0 0.0
  %29 = vmatpush1.msra.mxu0 %v21
  %30 = vmatprep.subr.mxu0 0.0
  %31 = vmatpush1.msra.mxu0 0.0
  %32 = vmatprep.subr.mxu0 0.0
  %33 = vmatpush1.msra.mxu0 0.0
  %34 = vmatprep.subr.mxu0 0.0
  %35 = vmatpush1.msra.mxu0 0.0
  %36 = vmatprep.subr.mxu0 0.0
  %37 = vmatpush1.msra.mxu0 0.0
  %38 = vmatprep.subr.mxu0 0.0
  %39 = vmatpush1.msra.mxu0 0.0
  %40 = vmatprep.subr.mxu0 0.0
  %41 = vmatpush1.msra.mxu0 0.0
  %42 = vmatprep.subr.mxu0 0.0
  %43 = vmatpush1.msra.mxu0 0.0
  %44 = vmatprep.subr.mxu0 0.0
  %45 = vmatpush1.msra.mxu0 0.0
  %46 = vmatprep.subr.mxu0 0.0
  %47 = vmatpush1.msra.mxu0 0.0
  %48 = vmatprep.subr.mxu0 0.0
  %49 = vmatpush1.msra.mxu0 0.0
  %50 = vmatprep.subr.mxu0 0.0
  %51 = vmatpush1.msra.mxu0 0.0
  %52 = vmatprep.subr.mxu0 0.0
  %53 = vmatpush1.msra.mxu0 0.0
  %54 = vmatprep.subr.mxu0 0.0
  %55 = vmatpush1.msra.mxu0 0.0
  %56 = vmatprep.subr.mxu0 0.0
  %57 = vmatpush1.msra.mxu0 0.0
  %58 = vmatprep.subr.mxu0 0.0
  %59 = vmatpush1.msra.mxu0 0.0
  %60 = vmatprep.subr.mxu0 0.0
  %61 = vmatpush1.msra.mxu0 0.0
  %62 = vmatprep.subr.mxu0 0.0
  %63 = vmatpush1.msra.mxu0 0.0
  %64 = vmatprep.subr.mxu0 0.0
  %65 = vmatpush1.msra.mxu0 0.0
  %66 = vmatprep.subr.mxu0 0.0
  %67 = vmatpush1.msra.mxu0 0.0
  %68 = vmatprep.subr.mxu0 0.0
  %69 = vmatpush1.msra.mxu0 0.0
  %70 = vmatprep.subr.mxu0 0.0
  %71 = vmatpush1.msra.mxu0 0.0
  %72 = vmatprep.subr.mxu0 0.0
  %73 = vmatpush1.msra.mxu0 0.0
  %74 = vmatprep.subr.mxu0 0.0
  %75 = vmatpush1.msra.mxu0 0.0
  %76 = vmatprep.subr.mxu0 0.0
  %77 = vmatpush1.msra.mxu0 0.0
  %78 = vmatprep.subr.mxu0 0.0
  %79 = vmatpush1.msra.mxu0 0.0
  %80 = vmatprep.subr.mxu0 0.0
  %81 = vmatpush1.msra.mxu0 0.0
  %82 = vmatprep.subr.mxu0 0.0
  %83 = vmatpush1.msra.mxu0 0.0
  %84 = vmatprep.subr.mxu0 0.0
  %85 = vmatpush1.msra.mxu0 0.0
  %86 = vmatprep.subr.mxu0 0.0
  %87 = vmatpush1.msra.mxu0 0.0
  %88 = vmatprep.subr.mxu0 0.0
  %89 = vmatpush1.msra.mxu0 0.0
  %90 = vmatprep.subr.mxu0 0.0
  %91 = vmatpush1.msra.mxu0 0.0
  %92 = vmatprep.mubr.f32.mxu0 0.0
  %93 = vmatmul.mubr.f32.gmra.mrb[0].mxu0 %v26
  %v94 = vpop.f32.mrb[0].mxu0
  %v95 = vadd.f32 0.0, %v94
  %v96 = vpop.f32.mrb[0].mxu0
  %97 = vdwg.mxu0
  %v98 = vadd.f32 %v22, %v95
  %99 = vst [vmem:[#allocation2] sm:$0xff] %v98
  // Predicated region
  $region18: #{label_propagation_gcn.5} parent=0 // pred_check
    %p100 = pneg %p14
  $region19: #{label_propagation_gcn.5} parent=0 // pred_check_branch
    %102 = sbr.rel (%p100) target = $region21
  $region20: #{label_propagation_gcn.5} parent=0 // pred_region
    %v103 = vld [vmem:[#allocation2] sm:$0xff]
    %v104 = vld [vmem:[%s2] sm:$0x1]
    %v106 = vlaneseq
    %v107 = vshrl.u32 %v106, 7
    %v108 = vsub.s32 0, %v107
    %v109 = vrot.slane %v104, %v108
    %v111 = vadd.f32 %v103, %v109
    %v112 = vmax.f32 %v111, 0.0
    %113 = vst [vmem:[%s3] sm:$0xff] %v112
  $region21: #{label_propagation_gcn.5} parent=0 // pred_fallthru
    _
  // Predicated region
  $region22: #{label_propagation_gcn.5} parent=0 // pred_check
    _
  $region23: #{label_propagation_gcn.5} parent=0 // pred_check_branch
    %115 = sbr.rel (0) target = $region25
  $region24: #{label_propagation_gcn.5} parent=0 // pred_region
    _
  $region25: #{label_propagation_gcn.5} parent=0 // pred_fallthru
    _
  // Predicated region
  $region26: #{label_propagation_gcn.5} parent=0 // pred_check
    _
  $region27: #{label_propagation_gcn.5} parent=0 // pred_check_branch
    %117 = sbr.rel (0) target = $region29
  $region28: #{label_propagation_gcn.5} parent=0 // pred_region
    _
  $region29: #{label_propagation_gcn.5} parent=0 // pred_fallthru
    _

</llo_original>
